<compile_context>
chip_gen: v5e
topology: v5e:2x2
jax: 0.10.0
libtpu: 0.0.40
codegen_flags: <defaults>
</compile_context>

<pallas_src>
import functools
import math
from dataclasses import dataclass

import numpy as np
import jax
import jax.numpy as jnp
from jax.experimental import pallas as pl
from jax.experimental.pallas import tpu as pltpu


@dataclass
class AudioArguments:
    transform: str = "stftw"
    sr: int = 16000
    n_fft: int = 256
    hop_length: int = 128
    fmin: float = 300.0
    fmax: float = 6000.0
    center: bool = False   # center=False -> no reflect padding, T = 1 + (L - n_fft)//hop


def _round_up(x: int, m: int) -> int:
    return ((x + m - 1) // m) * m


# ----------------------------------------------------------------------------
# Pallas kernel: windowed-frame DFT magnitude, freq-major output (fused transpose)
# ----------------------------------------------------------------------------
def _stft_mag_kernel(rows_ref, halo_ref, w_ref, out_ref, *, k, tile_t, f_pad, n_feats):
    # rows_ref: (tile_t,  row_w) f32   -- this tile's signal rows
    # halo_ref: (ext_rows, row_w) f32  -- next rows (overlap halo); unused when k == 1
    # w_ref:    (k*row_w, 2*f_pad) bf16 -- window-folded [cos | -sin] DFT basis
    # out_ref:  (n_feats, tile_t) f32  -- freq-major magnitudes for this frame tile
    if k == 1:
        frames = rows_ref[...]                                           # (tile_t, n_fft)
    else:
        ext = jnp.concatenate([rows_ref[...], halo_ref[...]], axis=0)    # (tile_t+halo, row_w)
        # frame t = rows[t] ++ rows[t+1] ++ ... ++ rows[t+k-1]  (lane concat)
        frames = jnp.concatenate([ext[j:j + tile_t, :] for j in range(k)], axis=1)

    # Single K = n_fft bf16 MXU matmul, f32 accumulation.
    acc = jnp.dot(frames.astype(jnp.bfloat16), w_ref[...],
                  preferred_element_type=jnp.float32)                    # (tile_t, 2*f_pad)
    re = acc[:, :f_pad]
    im = acc[:, f_pad:]
    mag = jnp.sqrt(re * re + im * im)                                    # (tile_t, f_pad)

    # Fused freq-major transpose (XLU); lane dim of the store is tile_t (>=128, dense).
    out_ref[...] = jnp.transpose(mag)[:n_feats, :]


def stft_spectrogram_pallas(rows: jax.Array, w: jax.Array, *,
                            n_frames: int, n_feats: int, f_pad: int, k: int,
                            max_tile: int = 1024) -> jax.Array:
    """rows: (B, R, row_w) f32 signal rows; w: (k*row_w, 2*f_pad) bf16 DFT basis.

    Returns (B, n_feats, n_frames) f32 magnitudes (freq-major, already sliced)."""
    B, R, row_w = rows.shape
    n_fft_rows, two_f = w.shape
    assert two_f == 2 * f_pad and n_frames >= 1 and k >= 1

    # Frame tile: large (default 1024) and a multiple of 128 so the fused-transpose
    # store is lane-dense; shrink only to keep >= 2 grid steps (two v7x TensorCores).
    tile_t = min(max_tile, _round_up(n_frames, 128))
    n_tiles = pl.cdiv(n_frames, tile_t)
    if B * n_tiles < 2 and tile_t > 128:
        tile_t = max(128, _round_up(pl.cdiv(n_frames, 2), 128))
        n_tiles = pl.cdiv(n_frames, tile_t)

    # Halo rows needed for the overlapping windows (k-1), rounded to an 8-aligned
    # power-of-two block so its element offset is an exact block index.
    ext_rows = 8
    while ext_rows < k - 1:
        ext_rows *= 2
    assert tile_t % ext_rows == 0
    halo_blocks = pl.cdiv(R, ext_rows)
    blocks_per_tile = tile_t // ext_rows

    def halo_map(b, i):
        # Halo starts right after this tile's rows; clamp so the block stays in-bounds.
        # (Whenever clamping triggers, no valid output frame reads the halo rows.)
        return (b, jnp.minimum((i + 1) * blocks_per_tile, halo_blocks - 1), 0)

    # Explicit VMEM budget (bounded, independent of clip length).
    bytes_main = tile_t * row_w * 4
    bytes_halo = ext_rows * row_w * 4
    bytes_w = n_fft_rows * two_f * 2
    bytes_out = n_feats * tile_t * 4
    bytes_work = 12 * tile_t * max(two_f, k * row_w) * 4      # concat/frames/acc/mag temps
    vmem_limit = 2 * (bytes_main + bytes_halo + bytes_w + bytes_out) + bytes_work + (4 << 20)
    vmem_limit = int(min(max(vmem_limit, 24 << 20), 56 << 20))

    kernel = functools.partial(_stft_mag_kernel, k=k, tile_t=tile_t,
                               f_pad=f_pad, n_feats=n_feats)

    return pl.pallas_call(
        kernel,
        out_shape=jax.ShapeDtypeStruct((B, n_feats, n_frames), jnp.float32),
        grid=(B, n_tiles),
        in_specs=[
            # Per-tile signal rows (bounded VMEM, auto double-buffered).
            pl.BlockSpec((None, tile_t, row_w), lambda b, i: (b, i, 0)),
            # Small halo block: the rows right after this tile (same array, 2nd view).
            pl.BlockSpec((None, ext_rows, row_w), halo_map),
            # Constant DFT basis: fetched once, resident for the whole grid.
            pl.BlockSpec((n_fft_rows, two_f), lambda b, i: (0, 0)),
        ],
        out_specs=pl.BlockSpec((None, n_feats, tile_t), lambda b, i: (b, 0, i)),
        compiler_params=pltpu.CompilerParams(
            dimension_semantics=("parallel", "parallel"),
            vmem_limit_bytes=vmem_limit),
    )(rows, rows, w)


# ----------------------------------------------------------------------------
# AudioFrontend forward (transform='stftw')
# ----------------------------------------------------------------------------
class AudioFrontendPallas:
    def __init__(self, config: AudioArguments) -> None:
        assert config.transform == "stftw", "only transform='stftw' implemented"
        # TODO(synk): 'logmel' and 'mfcc' branches (MelSpectrogram/AmplitudeToDB/MFCC)
        #             of AudioFrontend are not implemented.
        self.config = config
        n_fft, hop = config.n_fft, config.hop_length

        # Frequency-bin slice computed exactly like the PyTorch module (int truncation).
        freq_bins_f = 1 + n_fft / 2
        res = 0.5 * config.sr / freq_bins_f
        self.start_idx = int(config.fmin / res)
        self.end_idx = int(config.fmax / res)
        self.n_feats = self.end_idx - self.start_idx
        self.f_pad = max(128, _round_up(self.n_feats, 128))     # lane-dense matmul width

        # Fast path: each frame is k consecutive hop-width rows of the signal.
        self.fast = (n_fft % hop == 0) and (hop % 128 == 0)
        self.k = n_fft // hop if self.fast else 1
        self.row_w = hop if self.fast else n_fft

        # Window-folded, bin-sliced, lane-padded DFT basis (bf16), K-major = sample order:
        #   W[n, f]         = hann[n] *  cos(2*pi*n*(start_idx+f)/n_fft)
        #   W[n, f + f_pad] = hann[n] * -sin(2*pi*n*(start_idx+f)/n_fft)
        n = np.arange(n_fft, dtype=np.float64)
        hann = 0.5 - 0.5 * np.cos(2.0 * np.pi * n / n_fft)      # periodic Hann (torch default)
        bins = self.start_idx + np.arange(self.n_feats, dtype=np.float64)
        ang = 2.0 * np.pi * np.outer(n, bins) / n_fft
        w = np.zeros((n_fft, 2 * self.f_pad), dtype=np.float32)
        w[:, : self.n_feats] = (hann[:, None] * np.cos(ang)).astype(np.float32)
        w[:, self.f_pad: self.f_pad + self.n_feats] = (
            hann[:, None] * (-np.sin(ang))).astype(np.float32)
        self.w = jnp.asarray(w, dtype=jnp.bfloat16)             # (n_fft, 2*f_pad)

    def __call__(self, x: jax.Array) -> jax.Array:
        """x: (B, L) float -> (B, 1, n_feats, T) float32 (NCHW)."""
        cfg = self.config
        n_fft, hop = cfg.n_fft, cfg.hop_length
        if cfg.center:
            x = jnp.pad(x, ((0, 0), (n_fft // 2, n_fft // 2)), mode="reflect")
        x = x.astype(jnp.float32)
        B, L = x.shape
        T = 1 + (L - n_fft) // hop

        if self.fast:
            # No overlapped gather / frame duplication: view the signal as hop-wide rows.
            R = L // hop
            rows = x[:, : R * hop].reshape(B, R, hop)           # (B, R, hop)
        else:
            # General hop fallback: gathered frames, k=1 (each frame is one row).
            idx = jnp.arange(T)[:, None] * hop + jnp.arange(n_fft)[None, :]
            rows = x[:, idx]                                    # (B, T, n_fft)

        spec = stft_spectrogram_pallas(rows, self.w, n_frames=T, n_feats=self.n_feats,
                                       f_pad=self.f_pad, k=self.k)   # (B, n_feats, T)
        return spec[:, None, :, :]


# ----------------------------------------------------------------------------
# Pure-JAX f32 reference for a sanity check
# ----------------------------------------------------------------------------
def _reference(frontend: AudioFrontendPallas, x: jax.Array) -> jax.Array:
    cfg = frontend.config
    n_fft, hop = cfg.n_fft, cfg.hop_length
    if cfg.center:
        x = jnp.pad(x, ((0, 0), (n_fft // 2, n_fft // 2)), mode="reflect")
    x = x.astype(jnp.float32)
    B, L = x.shape
    T = 1 + (L - n_fft) // hop
    n = jnp.arange(n_fft, dtype=jnp.float32)
    hann = 0.5 - 0.5 * jnp.cos(2.0 * math.pi * n / n_fft)
    f = jnp.arange(n_fft // 2 + 1, dtype=jnp.float32)
    ang = 2.0 * math.pi * n[:, None] * f[None, :] / n_fft
    cosm, sinm = jnp.cos(ang), -jnp.sin(ang)
    idx = jnp.arange(T)[:, None] * hop + jnp.arange(n_fft)[None, :]
    frames = x[:, idx] * hann
    re = jnp.einsum("btn,nf->btf", frames, cosm)
    im = jnp.einsum("btn,nf->btf", frames, sinm)
    mag = jnp.sqrt(re * re + im * im)
    spec = mag.transpose(0, 2, 1)[:, frontend.start_idx:frontend.end_idx, :]
    return spec[:, None, :, :]


if __name__ == "__main__":
    cfg = AudioArguments()
    frontend = AudioFrontendPallas(cfg)

    # Small deterministic input: batch=2, data_length=2048 samples.
    key = jax.random.PRNGKey(0)
    x = jax.random.normal(key, (2, 2048), dtype=jnp.float32)

    out = jax.block_until_ready(frontend(x))

    # Shape check: (B, 1, n_feats, T)
    T = 1 + (2048 - cfg.n_fft) // cfg.hop_length
    assert out.shape == (2, 1, frontend.n_feats, T), out.shape

    # Numerical check vs f32 reference (kernel uses bf16 MXU inputs -> loose tol).
    ref = jax.block_until_ready(_reference(frontend, x))
    max_err = float(jnp.max(jnp.abs(out - ref)))
    scale = float(jnp.max(jnp.abs(ref)))
    assert max_err <= 2e-2 * scale + 1e-3, (max_err, scale)

    print("KERNEL_OK")
</pallas_src>

<mosaic_0001>
module attributes {stable_mosaic.version = 11 : i64} {
  func.func @_stft_mag_kernel(%arg0: i32, %arg1: i32, %arg2: memref<1x128x128xf32, #tpu.memory_space<vmem>>, %arg3: memref<1x8x128xf32, #tpu.memory_space<vmem>>, %arg4: memref<256x256xbf16, #tpu.memory_space<vmem>>, %arg5: memref<1x92x128xf32, #tpu.memory_space<vmem>>) attributes {dimension_semantics = [#tpu.dimension_semantics<parallel>, #tpu.dimension_semantics<parallel>], iteration_bounds = array<i64: 2, 1>, scalar_prefetch = 0 : i64, scratch_operands = 0 : i64, tpu.core_type = #tpu.core_type<tc>, window_params = [{transform_indices = @transform_0, window_bounds = array<i64: 1, 128, 128>}, {transform_indices = @transform_1, window_bounds = array<i64: 1, 8, 128>}, {pipeline_mode = #tpu.pipeline_mode<synchronous>, transform_indices = @transform_2, window_bounds = array<i64: 256, 256>}, {transform_indices = @transform_3, window_bounds = array<i64: 1, 92, 128>}]} {
    %c0 = arith.constant 0 : index
    %c0_0 = arith.constant 0 : index
    %c0_1 = arith.constant 0 : index
    %0 = vector.load %arg2[%c0, %c0_0, %c0_1] : memref<1x128x128xf32, #tpu.memory_space<vmem>>, vector<1x128x128xf32>
    %1 = vector.shape_cast %0 : vector<1x128x128xf32> to vector<128x128xf32>
    %c0_2 = arith.constant 0 : index
    %c0_3 = arith.constant 0 : index
    %c0_4 = arith.constant 0 : index
    %2 = vector.load %arg3[%c0_2, %c0_3, %c0_4] : memref<1x8x128xf32, #tpu.memory_space<vmem>>, vector<1x8x128xf32>
    %3 = vector.shape_cast %2 : vector<1x8x128xf32> to vector<8x128xf32>
    %4 = tpu.concatenate %1, %3 in 0 : vector<128x128xf32>, vector<8x128xf32> -> vector<136x128xf32>
    %5 = vector.extract_strided_slice %4 {offsets = [0, 0], sizes = [128, 128], strides = [1, 1]} : vector<136x128xf32> to vector<128x128xf32>
    %6 = vector.extract_strided_slice %4 {offsets = [1, 0], sizes = [128, 128], strides = [1, 1]} : vector<136x128xf32> to vector<128x128xf32>
    %7 = tpu.concatenate %5, %6 in 1 : vector<128x128xf32>, vector<128x128xf32> -> vector<128x256xf32>
    %8 = arith.truncf %7 : vector<128x256xf32> to vector<128x256xbf16>
    %c0_5 = arith.constant 0 : index
    %c0_6 = arith.constant 0 : index
    %9 = vector.load %arg4[%c0_5, %c0_6] : memref<256x256xbf16, #tpu.memory_space<vmem>>, vector<256x256xbf16>
    %cst = arith.constant dense<0.000000e+00> : vector<128x256xf32>
    %10 = tpu.matmul %8, %9, %cst {dimension_numbers = #tpu.dot_dimension_numbers<[1], [0], [0], [1], [0, 0, 1, 1], [], []>} : vector<128x256xbf16>, vector<256x256xbf16>, vector<128x256xf32> -> vector<128x256xf32>
    %11 = vector.extract_strided_slice %10 {offsets = [0, 0], sizes = [128, 128], strides = [1, 1]} : vector<128x256xf32> to vector<128x128xf32>
    %12 = vector.extract_strided_slice %10 {offsets = [0, 128], sizes = [128, 128], strides = [1, 1]} : vector<128x256xf32> to vector<128x128xf32>
    %13 = arith.mulf %11, %11 : vector<128x128xf32>
    %14 = arith.mulf %12, %12 : vector<128x128xf32>
    %15 = arith.addf %13, %14 : vector<128x128xf32>
    %16 = math.sqrt %15 : vector<128x128xf32>
    %17 = tpu.transpose %16, [1, 0] : vector<128x128xf32> -> vector<128x128xf32>
    %18 = vector.extract_strided_slice %17 {offsets = [0, 0], sizes = [92, 128], strides = [1, 1]} : vector<128x128xf32> to vector<92x128xf32>
    %c0_7 = arith.constant 0 : index
    %c0_8 = arith.constant 0 : index
    %c0_9 = arith.constant 0 : index
    %19 = vector.load %arg5[%c0_7, %c0_8, %c0_9] : memref<1x92x128xf32, #tpu.memory_space<vmem>>, vector<1x92x128xf32>
    %20 = vector.shape_cast %19 : vector<1x92x128xf32> to vector<92x128xf32>
    %21 = vector.shape_cast %18 : vector<92x128xf32> to vector<1x92x128xf32>
    tpu.vector_store %arg5[%c0_7, %c0_8, %c0_9], %21 {strides = array<i32>} : memref<1x92x128xf32, #tpu.memory_space<vmem>>, vector<1x92x128xf32>,
    return
  }
  func.func @transform_0(%arg0: i32, %arg1: i32) -> (i32, i32, i32) {
    %c0_i32 = arith.constant 0 : i32
    %c0_i32_0 = arith.constant 0 : i32
    return %arg0, %arg1, %c0_i32 : i32, i32, i32
  }
  func.func @transform_1(%arg0: i32, %arg1: i32) -> (i32, i32, i32) {
    %c1_i32 = arith.constant 1 : i32
    %0 = arith.addi %arg1, %c1_i32 : i32
    %c16_i32 = arith.constant 16 : i32
    %1 = arith.muli %0, %c16_i32 : i32
    %c1_i32_0 = arith.constant 1 : i32
    %2 = arith.minsi %1, %c1_i32_0 : i32
    %c0_i32 = arith.constant 0 : i32
    %c0_i32_1 = arith.constant 0 : i32
    return %arg0, %2, %c0_i32 : i32, i32, i32
  }
  func.func @transform_2(%arg0: i32, %arg1: i32) -> (i32, i32) {
    %c0_i32 = arith.constant 0 : i32
    %c0_i32_0 = arith.constant 0 : i32
    %c0_i32_1 = arith.constant 0 : i32
    return %c0_i32, %c0_i32_0 : i32, i32
  }
  func.func @transform_3(%arg0: i32, %arg1: i32) -> (i32, i32, i32) {
    %c0_i32 = arith.constant 0 : i32
    %c0_i32_0 = arith.constant 0 : i32
    return %arg0, %c0_i32, %arg1 : i32, i32, i32
  }
}

</mosaic_0001>

<llo_original>
// kernel: tpu_custom_call.1
$region0: #{tpu_custom_call.1}
  #allocation0 [shape = 'u32[]', space=smem, size = 0x4, offset = 0x4, fixed_abs, tag = 'smem constant byte address 0x4 - core index']
  #allocation1 [shape = 'u32[72,128]{1,0:T(1,128)}', space=vmem, size = 0x9000, scoped, tag = 'internal scratch']
  %s0 = inlined_call_operand.hbm [shape: f32[2,16,128], index: 0, kind: input, shape index: {}]
  %s1 = inlined_call_operand.hbm [shape: f32[2,16,128], index: 1, kind: input, shape index: {}]
  %s2 = inlined_call_operand.hbm [shape: bf16[256,256], index: 2, kind: input, shape index: {}]
  %s3 = inlined_call_operand.vmem [shape: f32[2,92,15], index: 3, kind: output, shape index: {}]
  %s4 = sld [smem:[#allocation0]]
  $region57: #{tpu_custom_call.1} parent=0
    _
  %s6 = ssub.s32 1, %s4
  %s7 = scalar_select 0, %s6, %s4
  $region1: #{tpu_custom_call.1} parent=0
    #allocation2 [shape = 'u8[131072]{0}', space=vmem, size = 0x20000, scoped, tag = 'input window, operand 0']
    #allocation3 [shape = 's32[2]{0}', space=sflag, size = 0x8, scoped, tag = 'scoped memory for tpu_custom_call.1']
    #allocation4 [shape = 'u8[8192]{0}', space=vmem, size = 0x2000, scoped, tag = 'input window, operand 1']
    #allocation5 [shape = 's32[2]{0}', space=sflag, size = 0x8, scoped, tag = 'scoped memory for tpu_custom_call.1']
    #allocation6 [shape = 'u8[131072]{0}', space=vmem, size = 0x20000, scoped, tag = 'input window, operand 2, single buffered']
    %8 = vsyncpa [#allocation3], 0
    %s9 = scalar_lea.sflag [#allocation3], 1
    %10 = vsyncpa %s9, 0
    %11 = vsyncpa [#allocation5], 0
    %s12 = scalar_lea.sflag [#allocation5], 1
    %13 = vsyncpa %s12, 0
    loop: start=0, step=1, limit=4
    $region2: #{tpu_custom_call.1} parent=1 // loop_pre_header
      _
    $region3: #{tpu_custom_call.1} parent=1 // loop_header
      %s15 = sphi 0, %s19
      %p16 = scmp.ge.s32.totalorder %s15, 4
      %s22 = sphi 0, %s34
      %s23 = sphi 0, %s30
      %s24 = sphi 0, %s22
      %s25 = sphi 0, %s23
      %s26 = sphi 0, %s24
      %s27 = sphi 0, %s25
      %s39 = sphi 0, %s41
      %s42 = sphi 0, %s39
      %s43 = sphi 0, %s42
      %s59 = sphi 0, %s43
      %s75 = sphi 0, %s77
      %s78 = sphi 0, %s75
      %s79 = sphi 0, %s78
      %s95 = sphi 0, %s79
      %s99 = sphi 0, %s99
      %s101 = sphi 0, %s99
      %s102 = sphi 0, %s101
      %s116 = sphi 0, %s102
      %s124 = sphi 0, %s126
      %s127 = sphi 0, %s124
      %s128 = sphi 0, %s127
      %s144 = sphi 0, %s128
    $region4: #{tpu_custom_call.1} parent=1 // loop_header_branch
      %18 = sbr.rel (%p16) target = $region8
    $region5: #{tpu_custom_call.1} parent=1 // loop_body
      %s20 = ssub.s32 %s15, 1
      %s21 = ssub.s32 %s15, 2
      %s28 = sadd.s32 1, %s23
      %p29 = scmp.ge.s32.totalorder %s28, 1
      %s30 = scalar_select %p29, 0, %s28
      %s31 = sadd.s32 1, %s22
      %s32 = scalar_select %p29, %s31, %s22
      %p33 = scmp.ge.s32.totalorder %s32, 2
      %s34 = scalar_select %p33, 0, %s32
      %s35 = ssub.s32 %s22, %s34
      %s36 = ssub.s32 %s23, %s30
      %s37 = sor.u32 %s35, %s36
      %p38 = scmp.eq.s32.totalorder %s37, 0
      %s40 = sadd.s32 %s39, 1
      %s41 = scalar_select %p38, %s39, %s40
      %p44 = pneg %p38
      %p45 = scmp.eq.s32.totalorder %s15, 1
      %p46 = por %p44, %p45
      %p47 = scmp.ne.s32.totalorder %s39, %s42
      %p48 = scmp.eq.s32.totalorder %s15, 0
      %p49 = por %p47, %p48
      %p50 = scmp.ne.s32.totalorder %s39, %s42
      %p51 = scmp.eq.s32.totalorder %s20, 1
      %p52 = por %p50, %p51
      %p53 = scmp.ne.s32.totalorder %s42, %s43
      %p54 = scmp.eq.s32.totalorder %s20, 0
      %p55 = por %p53, %p54
      %p56 = scmp.ne.s32.totalorder %s42, %s43
      %p57 = scmp.eq.s32.totalorder %s21, 1
      %p58 = por %p56, %p57
      %p60 = scmp.ne.s32.totalorder %s43, %s59
      %p61 = scmp.eq.s32.totalorder %s21, 0
      %p62 = por %p60, %p61
      %s63 = sadd.s32 %s23, 1
      %s64 = smul.u32 %s63, 16
      %p65 = scmp.lt.s32.totalorder %s64, 1
      %s66 = scalar_select %p65, %s64, 1
      %s67 = sadd.s32 %s30, 1
      %s68 = smul.u32 %s67, 16
      %p69 = scmp.lt.s32.totalorder %s68, 1
      %s70 = scalar_select %p69, %s68, 1
      %s71 = ssub.s32 %s22, %s34
      %s72 = ssub.s32 %s66, %s70
      %s73 = sor.u32 %s71, %s72
      %p74 = scmp.eq.s32.totalorder %s73, 0
      %s76 = sadd.s32 %s75, 1
      %s77 = scalar_select %p74, %s75, %s76
      %p80 = pneg %p74
      %p81 = scmp.eq.s32.totalorder %s15, 1
      %p82 = por %p80, %p81
      %p83 = scmp.ne.s32.totalorder %s75, %s78
      %p84 = scmp.eq.s32.totalorder %s15, 0
      %p85 = por %p83, %p84
      %p86 = scmp.ne.s32.totalorder %s75, %s78
      %p87 = scmp.eq.s32.totalorder %s20, 1
      %p88 = por %p86, %p87
      %p89 = scmp.ne.s32.totalorder %s78, %s79
      %p90 = scmp.eq.s32.totalorder %s20, 0
      %p91 = por %p89, %p90
      %p92 = scmp.ne.s32.totalorder %s78, %s79
      %p93 = scmp.eq.s32.totalorder %s21, 1
      %p94 = por %p92, %p93
      %p96 = scmp.ne.s32.totalorder %s79, %s95
      %p97 = scmp.eq.s32.totalorder %s21, 0
      %p98 = por %p96, %p97
      %s100 = sadd.s32 %s99, 1
      %p103 = scmp.eq.s32.totalorder %s15, 1
      %p104 = scmp.ne.s32.totalorder %s99, %s101
      %p105 = scmp.eq.s32.totalorder %s15, 0
      %p106 = por %p104, %p105
      %p107 = scmp.ne.s32.totalorder %s99, %s101
      %p108 = scmp.eq.s32.totalorder %s20, 1
      %p109 = por %p107, %p108
      %p110 = scmp.ne.s32.totalorder %s101, %s102
      %p111 = scmp.eq.s32.totalorder %s20, 0
      %p112 = por %p110, %p111
      %p113 = scmp.ne.s32.totalorder %s101, %s102
      %p114 = scmp.eq.s32.totalorder %s21, 1
      %p115 = por %p113, %p114
      %p117 = scmp.ne.s32.totalorder %s102, %s116
      %p118 = scmp.eq.s32.totalorder %s21, 0
      %p119 = por %p117, %p118
      %s120 = ssub.s32 %s22, %s34
      %s121 = ssub.s32 %s23, %s30
      %s122 = sor.u32 %s120, %s121
      %p123 = scmp.eq.s32.totalorder %s122, 0
      %s125 = sadd.s32 %s124, 1
      %s126 = scalar_select %p123, %s124, %s125
      %p129 = pneg %p123
      %p130 = scmp.eq.s32.totalorder %s15, 1
      %p131 = por %p129, %p130
      %p132 = scmp.ne.s32.totalorder %s124, %s127
      %p133 = scmp.eq.s32.totalorder %s15, 0
      %p134 = por %p132, %p133
      %p135 = scmp.ne.s32.totalorder %s124, %s127
      %p136 = scmp.eq.s32.totalorder %s20, 1
      %p137 = por %p135, %p136
      %p138 = scmp.ne.s32.totalorder %s127, %s128
      %p139 = scmp.eq.s32.totalorder %s20, 0
      %p140 = por %p138, %p139
      %p141 = scmp.ne.s32.totalorder %s127, %s128
      %p142 = scmp.eq.s32.totalorder %s21, 1
      %p143 = por %p141, %p142
      %p145 = scmp.ne.s32.totalorder %s128, %s144
      %p146 = scmp.eq.s32.totalorder %s21, 0
      %p147 = por %p145, %p146
      %p148 = scmp.le.s32.totalorder 1, %s15
      %p149 = scmp.lt.s32.totalorder %s15, 3
      %p150 = pnand %p148, %p149
      %p151 = pneg %p150
      // Predicated region
      $region9: #{tpu_custom_call.1} parent=5 // pred_check
        _
      $region10: #{tpu_custom_call.1} parent=5 // pred_check_branch
        %153 = sbr.rel (%p150) target = $region12
      $region11: #{tpu_custom_call.1} parent=5 // pred_region
        %s154 = ssub.s32 %s15, 1
        // Predicated region
        $region13: #{tpu_custom_call.1} parent=11 // pred_check
          %p155 = pneg %p112
        $region14: #{tpu_custom_call.1} parent=11 // pred_check_branch
          %157 = sbr.rel (%p155) target = $region16
        $region15: #{tpu_custom_call.1} parent=11 // pred_region
          %159 = vsyncadd [#allocation5], 0
          %s160 = sshll.u32 %s2, 4
          %s161 = int_to_ptr.hbm [resolvable:$true] %s160
          %s162 = sshll.u32 [#allocation6], 4
          %s163 = int_to_ptr.vmem [resolvable:$true] %s162
          %168 = dma.hbm_to_vmem [thread:$0]  %s161, 4096, %s163, [#allocation5], 128, 128, 8
        $region16: #{tpu_custom_call.1} parent=11 // pred_fallthru
          _
      $region12: #{tpu_custom_call.1} parent=5 // pred_fallthru
        _
      %p169 = scmp.lt.s32.totalorder %s15, 2
      // Predicated region
      $region17: #{tpu_custom_call.1} parent=5 // pred_check
        %p170 = pneg %p169
      $region18: #{tpu_custom_call.1} parent=5 // pred_check_branch
        %172 = sbr.rel (%p170) target = $region20
      $region19: #{tpu_custom_call.1} parent=5 // pred_region
        // Predicated region
        $region21: #{tpu_custom_call.1} parent=19 // pred_check
          %p173 = pneg %p49
        $region22: #{tpu_custom_call.1} parent=19 // pred_check_branch
          %175 = sbr.rel (%p173) target = $region24
        $region23: #{tpu_custom_call.1} parent=19 // pred_region
          %s176 = sand.u32 %s39, 1
          %s177 = scalar_lea.sflag [#allocation3], %s176
          %s178 = sand.u32 %s39, 1
          %s179 = smul.addr %s178, 128
          %s180 = scalar_lea.vmem [#allocation2], %s179
          %s181 = smul.u32 16, %s23
          %s182 = ssub.s32 2, %s181
          %s183 = smul.u32 8, %s182
          %s184 = ssub.s32 128, %s183
          %s185 = sshll.u32 %s184, 4
          %186 = vsyncadd %s177, %s185
          %p187 = scmp.ne.s32.totalorder 0, %s183
          %s188 = smul.addr %s22, 2
          %s189 = sadd.s32 %s181, %s188
          %s190 = smul.addr %s189, 8
          %s191 = scalar_lea.hbm %s0, %s190
          %s192 = smul.u32 8, %s182
          %s193 = sshll.u32 %s191, 4
          %s194 = int_to_ptr.hbm [resolvable:$true] %s193
          %s195 = sshll.u32 %s180, 4
          %s196 = int_to_ptr.vmem [resolvable:$true] %s195
          %s197 = sshll.u32 %s192, 4
          %201 = dma.hbm_to_vmem [thread:$0]  (%p187), %s194, %s197, %s196, %s177, 128, 128, 8
        $region24: #{tpu_custom_call.1} parent=19 // pred_fallthru
          _
        // Predicated region
        $region25: #{tpu_custom_call.1} parent=19 // pred_check
          %p202 = pneg %p85
        $region26: #{tpu_custom_call.1} parent=19 // pred_check_branch
          %204 = sbr.rel (%p202) target = $region28
        $region27: #{tpu_custom_call.1} parent=19 // pred_region
          %s205 = sand.u32 %s15, 1
          %s206 = scalar_lea.sflag [#allocation5], %s205
          %s207 = sand.u32 %s75, 1
          %s208 = smul.addr %s207, 8
          %s209 = scalar_lea.vmem [#allocation4], %s208
          %s210 = sadd.s32 %s23, 1
          %s211 = smul.u32 %s210, 16
          %p212 = scmp.lt.s32.totalorder %s211, 1
          %s213 = scalar_select %p212, %s211, 1
          %215 = vsyncadd %s206, 0
          %s216 = smul.addr %s22, 2
          %s217 = sadd.s32 %s213, %s216
          %s218 = smul.addr %s217, 8
          %s219 = scalar_lea.hbm %s1, %s218
          %s221 = sshll.u32 %s219, 4
          %s222 = int_to_ptr.hbm [resolvable:$true] %s221
          %s223 = sshll.u32 %s209, 4
          %s224 = int_to_ptr.vmem [resolvable:$true] %s223
          %226 = dma.hbm_to_vmem [thread:$0]  %s222, 128, %s224, %s206
        $region28: #{tpu_custom_call.1} parent=19 // pred_fallthru
          _
      $region20: #{tpu_custom_call.1} parent=5 // pred_fallthru
        _
      %p227 = scmp.le.s32.totalorder 1, %s15
      %p228 = scmp.lt.s32.totalorder %s15, 3
      %p229 = pnand %p227, %p228
      %p230 = pneg %p229
      // Predicated region
      $region29: #{tpu_custom_call.1} parent=5 // pred_check
        _
      $region30: #{tpu_custom_call.1} parent=5 // pred_check_branch
        %232 = sbr.rel (%p229) target = $region32
      $region31: #{tpu_custom_call.1} parent=5 // pred_region
        %s233 = ssub.s32 %s15, 1
        %s234 = sand.u32 %s42, 1
        %s235 = scalar_lea.sflag [#allocation3], %s234
        %s236 = sand.u32 %s42, 1
        %s237 = smul.addr %s236, 128
        %s238 = scalar_lea.vmem [#allocation2], %s237
        // Predicated region
        $region33: #{tpu_custom_call.1} parent=31 // pred_check
          %p239 = pneg %p55
        $region34: #{tpu_custom_call.1} parent=31 // pred_check_branch
          %241 = sbr.rel (%p239) target = $region36
        $region35: #{tpu_custom_call.1} parent=31 // pred_region
          %243 = dma.done %s235, 2048
        $region36: #{tpu_custom_call.1} parent=31 // pred_fallthru
          _
        %s244 = sand.u32 %s20, 1
        %s245 = scalar_lea.sflag [#allocation5], %s244
        %s246 = sand.u32 %s78, 1
        %s247 = smul.addr %s246, 8
        %s248 = scalar_lea.vmem [#allocation4], %s247
        // Predicated region
        $region37: #{tpu_custom_call.1} parent=31 // pred_check
          %p249 = pneg %p91
        $region38: #{tpu_custom_call.1} parent=31 // pred_check_branch
          %251 = sbr.rel (%p249) target = $region40
        $region39: #{tpu_custom_call.1} parent=31 // pred_region
          %253 = dma.done %s245, 128
        $region40: #{tpu_custom_call.1} parent=31 // pred_fallthru
          _
        // Predicated region
        $region41: #{tpu_custom_call.1} parent=31 // pred_check
          %p254 = pneg %p112
        $region42: #{tpu_custom_call.1} parent=31 // pred_check_branch
          %256 = sbr.rel (%p254) target = $region44
        $region43: #{tpu_custom_call.1} parent=31 // pred_region
          %258 = dma.done [#allocation5], 4096
        $region44: #{tpu_custom_call.1} parent=31 // pred_fallthru
          _
        %s259 = sand.u32 %s42, 1
        %s260 = scalar_lea.sflag [#allocation3], %s259
        %s261 = sand.u32 %s42, 1
        %s262 = smul.addr %s261, 128
        %s263 = scalar_lea.vmem [#allocation2], %s262
        %p264 = pneg %p55
        %p265 = pneg %p52
        %s266 = sand.u32 %s20, 1
        %s267 = scalar_lea.sflag [#allocation5], %s266
        %s268 = sand.u32 %s78, 1
        %s269 = smul.addr %s268, 8
        %s270 = scalar_lea.vmem [#allocation4], %s269
        %p271 = pneg %p91
        %p272 = pneg %p88
        %p273 = pneg %p112
        %p274 = pneg %p109
        %p275 = pneg %p140
        %p276 = pneg %p137
        %p277 = scmp.lt.s32.totalorder %s24, 1
        %s278 = scalar_select %p277, %s24, 1
        %p279 = scmp.lt.s32.totalorder %s25, 0
        %s280 = scalar_select %p279, %s25, 0
        %s281 = smul.addr %s278, 12
        %s282 = sadd.s32 %s280, %s281
        %s283 = smul.addr %s282, 8
        %s284 = scalar_lea.vmem %s3, %s283
        %s285 = smul.u32 16, %s25
        %s286 = ssub.s32 2, %s285
        %s287 = smul.u32 8, %s286
        %s288 = sadd.s32 %s25, 1
        %s289 = smul.u32 %s288, 16
        %p290 = scmp.lt.s32.totalorder %s289, 1
        %s291 = scalar_select %p290, %s289, 1
        %p292 = scmp.lt.s32.totalorder %s24, 1
        %s293 = scalar_select %p292, %s24, 1
        %p294 = scmp.lt.s32.totalorder %s25, 0
        %s295 = scalar_select %p294, %s25, 0
        %s296 = smul.addr %s293, 12
        %s297 = sadd.s32 %s295, %s296
        %s298 = smul.addr %s297, 8
        %s299 = scalar_lea.vmem %s3, %s298
        %v300 = vld [vmem:[%s238] sm:$0xff]
        %v301 = vld [vmem:[%s238 + $0x8] sm:$0xff]
        %v302 = vld [vmem:[%s238 + $0x10] sm:$0xff]
        %v303 = vld [vmem:[%s238 + $0x18] sm:$0xff]
        %v304 = vld [vmem:[%s238 + $0x20] sm:$0xff]
        %v305 = vld [vmem:[%s238 + $0x28] sm:$0xff]
        %v306 = vld [vmem:[%s238 + $0x30] sm:$0xff]
        %v307 = vld [vmem:[%s238 + $0x38] sm:$0xff]
        %v308 = vld [vmem:[%s238 + $0x40] sm:$0xff]
        %v309 = vld [vmem:[%s238 + $0x48] sm:$0xff]
        %v310 = vld [vmem:[%s238 + $0x50] sm:$0xff]
        %v311 = vld [vmem:[%s238 + $0x58] sm:$0xff]
        %v312 = vld [vmem:[%s238 + $0x60] sm:$0xff]
        %v313 = vld [vmem:[%s238 + $0x68] sm:$0xff]
        %v314 = vld [vmem:[%s238 + $0x70] sm:$0xff]
        %v315 = vld [vmem:[%s238 + $0x78] sm:$0xff]
        %v316 = vld [vmem:[%s248] sm:$0xff]
        %vm334 = vcmask 1046528
        %v335 = vrot.slane %v300, 1
        %v336 = vrot.slane %v301, 1
        %v337 = vsel %vm334, %v335, %v336
        %v338 = vrot.slane %v302, 1
        %v339 = vsel %vm334, %v336, %v338
        %v340 = vrot.slane %v303, 1
        %v341 = vsel %vm334, %v338, %v340
        %v342 = vrot.slane %v304, 1
        %v343 = vsel %vm334, %v340, %v342
        %v344 = vrot.slane %v305, 1
        %v345 = vsel %vm334, %v342, %v344
        %v346 = vrot.slane %v306, 1
        %v347 = vsel %vm334, %v344, %v346
        %v348 = vrot.slane %v307, 1
        %v349 = vsel %vm334, %v346, %v348
        %v350 = vrot.slane %v308, 1
        %v351 = vsel %vm334, %v348, %v350
        %v352 = vrot.slane %v309, 1
        %v353 = vsel %vm334, %v350, %v352
        %v354 = vrot.slane %v310, 1
        %v355 = vsel %vm334, %v352, %v354
        %v356 = vrot.slane %v311, 1
        %v357 = vsel %vm334, %v354, %v356
        %v358 = vrot.slane %v312, 1
        %v359 = vsel %vm334, %v356, %v358
        %v360 = vrot.slane %v313, 1
        %v361 = vsel %vm334, %v358, %v360
        %v362 = vrot.slane %v314, 1
        %v363 = vsel %vm334, %v360, %v362
        %v364 = vrot.slane %v315, 1
        %v365 = vsel %vm334, %v362, %v364
        %v366 = vrot.slane %v316, 1
        %v367 = vsel %vm334, %v364, %v366
        %v384 = vpack.c.bf16 %v301, %v300
        %v385 = vpack.c.bf16 %v339, %v337
        %v386 = vpack.c.bf16 %v303, %v302
        %v387 = vpack.c.bf16 %v343, %v341
        %v388 = vpack.c.bf16 %v305, %v304
        %v389 = vpack.c.bf16 %v347, %v345
        %v390 = vpack.c.bf16 %v307, %v306
        %v391 = vpack.c.bf16 %v351, %v349
        %v392 = vpack.c.bf16 %v309, %v308
        %v393 = vpack.c.bf16 %v355, %v353
        %v394 = vpack.c.bf16 %v311, %v310
        %v395 = vpack.c.bf16 %v359, %v357
        %v396 = vpack.c.bf16 %v313, %v312
        %v397 = vpack.c.bf16 %v363, %v361
        %v398 = vpack.c.bf16 %v315, %v314
        %v399 = vpack.c.bf16 %v367, %v365
        %v400 = vld [vmem:[#allocation6] sm:$0xff]
        %v401 = vld [vmem:[#allocation6 + $0x8] sm:$0xff]
        %v402 = vld [vmem:[#allocation6 + $0x10] sm:$0xff]
        %v403 = vld [vmem:[#allocation6 + $0x18] sm:$0xff]
        %v404 = vld [vmem:[#allocation6 + $0x20] sm:$0xff]
        %v405 = vld [vmem:[#allocation6 + $0x28] sm:$0xff]
        %v406 = vld [vmem:[#allocation6 + $0x30] sm:$0xff]
        %v407 = vld [vmem:[#allocation6 + $0x38] sm:$0xff]
        %v408 = vld [vmem:[#allocation6 + $0x40] sm:$0xff]
        %v409 = vld [vmem:[#allocation6 + $0x48] sm:$0xff]
        %v410 = vld [vmem:[#allocation6 + $0x50] sm:$0xff]
        %v411 = vld [vmem:[#allocation6 + $0x58] sm:$0xff]
        %v412 = vld [vmem:[#allocation6 + $0x60] sm:$0xff]
        %v413 = vld [vmem:[#allocation6 + $0x68] sm:$0xff]
        %v414 = vld [vmem:[#allocation6 + $0x70] sm:$0xff]
        %v415 = vld [vmem:[#allocation6 + $0x78] sm:$0xff]
        %v416 = vld [vmem:[#allocation6 + $0x80] sm:$0xff]
        %v417 = vld [vmem:[#allocation6 + $0x88] sm:$0xff]
        %v418 = vld [vmem:[#allocation6 + $0x90] sm:$0xff]
        %v419 = vld [vmem:[#allocation6 + $0x98] sm:$0xff]
        %v420 = vld [vmem:[#allocation6 + $0xa0] sm:$0xff]
        %v421 = vld [vmem:[#allocation6 + $0xa8] sm:$0xff]
        %v422 = vld [vmem:[#allocation6 + $0xb0] sm:$0xff]
        %v423 = vld [vmem:[#allocation6 + $0xb8] sm:$0xff]
        %v424 = vld [vmem:[#allocation6 + $0xc0] sm:$0xff]
        %v425 = vld [vmem:[#allocation6 + $0xc8] sm:$0xff]
        %v426 = vld [vmem:[#allocation6 + $0xd0] sm:$0xff]
        %v427 = vld [vmem:[#allocation6 + $0xd8] sm:$0xff]
        %v428 = vld [vmem:[#allocation6 + $0xe0] sm:$0xff]
        %v429 = vld [vmem:[#allocation6 + $0xe8] sm:$0xff]
        %v430 = vld [vmem:[#allocation6 + $0xf0] sm:$0xff]
        %v431 = vld [vmem:[#allocation6 + $0xf8] sm:$0xff]
        %v464 = vunpack.c.l.b16 %v400
        %v465 = vunpack.c.h.b16 %v400
        %v466 = vunpack.c.l.b16 %v401
        %v467 = vunpack.c.h.b16 %v401
        %v468 = vunpack.c.l.b16 %v402
        %v469 = vunpack.c.h.b16 %v402
        %v470 = vunpack.c.l.b16 %v403
        %v471 = vunpack.c.h.b16 %v403
        %v472 = vunpack.c.l.b16 %v404
        %v473 = vunpack.c.h.b16 %v404
        %v474 = vunpack.c.l.b16 %v405
        %v475 = vunpack.c.h.b16 %v405
        %v476 = vunpack.c.l.b16 %v406
        %v477 = vunpack.c.h.b16 %v406
        %v478 = vunpack.c.l.b16 %v407
        %v479 = vunpack.c.h.b16 %v407
        %v480 = vunpack.c.l.b16 %v408
        %v481 = vunpack.c.h.b16 %v408
        %v482 = vunpack.c.l.b16 %v409
        %v483 = vunpack.c.h.b16 %v409
        %v484 = vunpack.c.l.b16 %v410
        %v485 = vunpack.c.h.b16 %v410
        %v486 = vunpack.c.l.b16 %v411
        %v487 = vunpack.c.h.b16 %v411
        %v488 = vunpack.c.l.b16 %v412
        %v489 = vunpack.c.h.b16 %v412
        %v490 = vunpack.c.l.b16 %v413
        %v491 = vunpack.c.h.b16 %v413
        %v492 = vunpack.c.l.b16 %v414
        %v493 = vunpack.c.h.b16 %v414
        %v494 = vunpack.c.l.b16 %v415
        %v495 = vunpack.c.h.b16 %v415
        %v496 = vunpack.c.l.b16 %v416
        %v497 = vunpack.c.h.b16 %v416
        %v498 = vunpack.c.l.b16 %v417
        %v499 = vunpack.c.h.b16 %v417
        %v500 = vunpack.c.l.b16 %v418
        %v501 = vunpack.c.h.b16 %v418
        %v502 = vunpack.c.l.b16 %v419
        %v503 = vunpack.c.h.b16 %v419
        %v504 = vunpack.c.l.b16 %v420
        %v505 = vunpack.c.h.b16 %v420
        %v506 = vunpack.c.l.b16 %v421
        %v507 = vunpack.c.h.b16 %v421
        %v508 = vunpack.c.l.b16 %v422
        %v509 = vunpack.c.h.b16 %v422
        %v510 = vunpack.c.l.b16 %v423
        %v511 = vunpack.c.h.b16 %v423
        %v512 = vunpack.c.l.b16 %v424
        %v513 = vunpack.c.h.b16 %v424
        %v514 = vunpack.c.l.b16 %v425
        %v515 = vunpack.c.h.b16 %v425
        %v516 = vunpack.c.l.b16 %v426
        %v517 = vunpack.c.h.b16 %v426
        %v518 = vunpack.c.l.b16 %v427
        %v519 = vunpack.c.h.b16 %v427
        %v520 = vunpack.c.l.b16 %v428
        %v521 = vunpack.c.h.b16 %v428
        %v522 = vunpack.c.l.b16 %v429
        %v523 = vunpack.c.h.b16 %v429
        %v524 = vunpack.c.l.b16 %v430
        %v525 = vunpack.c.h.b16 %v430
        %v526 = vunpack.c.l.b16 %v431
        %v527 = vunpack.c.h.b16 %v431
        %v528 = vpack.c.b16 %v466, %v464
        %v529 = vpack.c.b16 %v467, %v465
        %v530 = vpack.c.b16 %v470, %v468
        %v531 = vpack.c.b16 %v471, %v469
        %v532 = vpack.c.b16 %v474, %v472
        %v533 = vpack.c.b16 %v475, %v473
        %v534 = vpack.c.b16 %v478, %v476
        %v535 = vpack.c.b16 %v479, %v477
        %v536 = vpack.c.b16 %v482, %v480
        %v537 = vpack.c.b16 %v483, %v481
        %v538 = vpack.c.b16 %v486, %v484
        %v539 = vpack.c.b16 %v487, %v485
        %v540 = vpack.c.b16 %v490, %v488
        %v541 = vpack.c.b16 %v491, %v489
        %v542 = vpack.c.b16 %v494, %v492
        %v543 = vpack.c.b16 %v495, %v493
        %v544 = vpack.c.b16 %v498, %v496
        %v545 = vpack.c.b16 %v499, %v497
        %v546 = vpack.c.b16 %v502, %v500
        %v547 = vpack.c.b16 %v503, %v501
        %v548 = vpack.c.b16 %v506, %v504
        %v549 = vpack.c.b16 %v507, %v505
        %v550 = vpack.c.b16 %v510, %v508
        %v551 = vpack.c.b16 %v511, %v509
        %v552 = vpack.c.b16 %v514, %v512
        %v553 = vpack.c.b16 %v515, %v513
        %v554 = vpack.c.b16 %v518, %v516
        %v555 = vpack.c.b16 %v519, %v517
        %v556 = vpack.c.b16 %v522, %v520
        %v557 = vpack.c.b16 %v523, %v521
        %v558 = vpack.c.b16 %v526, %v524
        %v559 = vpack.c.b16 %v527, %v525
        %592 = vmatpush.bf16.msra.mxu0 %v542
        %593 = vmatpush.bf16.msra.mxu0 %v540
        %594 = vmatpush.bf16.msra.mxu0 %v538
        %595 = vmatpush.bf16.msra.mxu0 %v536
        %596 = vmatpush.bf16.msra.mxu0 %v534
        %597 = vmatpush.bf16.msra.mxu0 %v532
        %598 = vmatpush.bf16.msra.mxu0 %v530
        %599 = vmatpush.bf16.msra.mxu0 %v528
        %600 = vmatmul.bf16.gmra.mxu0 %v384
        %v601 = vpop.f32.mrf.mxu0
        %v602 = vadd.f32 0.0, %v601
        %v603 = vpop.f32.mrf.mxu0
        %v604 = vadd.f32 0.0, %v603
        %605 = vmatmul.bf16.gmra.mxu0 %v386
        %v606 = vpop.f32.mrf.mxu0
        %v607 = vadd.f32 0.0, %v606
        %v608 = vpop.f32.mrf.mxu0
        %v609 = vadd.f32 0.0, %v608
        %610 = vmatmul.bf16.gmra.mxu0 %v388
        %v611 = vpop.f32.mrf.mxu0
        %v612 = vadd.f32 0.0, %v611
        %v613 = vpop.f32.mrf.mxu0
        %v614 = vadd.f32 0.0, %v613
        %615 = vmatmul.bf16.gmra.mxu0 %v390
        %v616 = vpop.f32.mrf.mxu0
        %v617 = vadd.f32 0.0, %v616
        %v618 = vpop.f32.mrf.mxu0
        %v619 = vadd.f32 0.0, %v618
        %620 = vmatmul.bf16.gmra.mxu0 %v392
        %v621 = vpop.f32.mrf.mxu0
        %v622 = vadd.f32 0.0, %v621
        %v623 = vpop.f32.mrf.mxu0
        %v624 = vadd.f32 0.0, %v623
        %625 = vmatmul.bf16.gmra.mxu0 %v394
        %v626 = vpop.f32.mrf.mxu0
        %v627 = vadd.f32 0.0, %v626
        %v628 = vpop.f32.mrf.mxu0
        %v629 = vadd.f32 0.0, %v628
        %630 = vmatmul.bf16.gmra.mxu0 %v396
        %v631 = vpop.f32.mrf.mxu0
        %v632 = vadd.f32 0.0, %v631
        %v633 = vpop.f32.mrf.mxu0
        %v634 = vadd.f32 0.0, %v633
        %635 = vmatmul.bf16.gmra.mxu0 %v398
        %v636 = vpop.f32.mrf.mxu0
        %v637 = vadd.f32 0.0, %v636
        %v638 = vpop.f32.mrf.mxu0
        %v639 = vadd.f32 0.0, %v638
        %640 = vdwg.mxu0
        %641 = vmatpush.bf16.msra.mxu0 %v558
        %642 = vmatpush.bf16.msra.mxu0 %v556
        %643 = vmatpush.bf16.msra.mxu0 %v554
        %644 = vmatpush.bf16.msra.mxu0 %v552
        %645 = vmatpush.bf16.msra.mxu0 %v550
        %646 = vmatpush.bf16.msra.mxu0 %v548
        %647 = vmatpush.bf16.msra.mxu0 %v546
        %648 = vmatpush.bf16.msra.mxu0 %v544
        %649 = vmatmul.bf16.gmra.mxu0 %v385
        %v650 = vpop.f32.mrf.mxu0
        %v651 = vadd.f32 %v602, %v650
        %v652 = vpop.f32.mrf.mxu0
        %v653 = vadd.f32 %v604, %v652
        %654 = vmatmul.bf16.gmra.mxu0 %v387
        %v655 = vpop.f32.mrf.mxu0
        %v656 = vadd.f32 %v607, %v655
        %v657 = vpop.f32.mrf.mxu0
        %v658 = vadd.f32 %v609, %v657
        %659 = vmatmul.bf16.gmra.mxu0 %v389
        %v660 = vpop.f32.mrf.mxu0
        %v661 = vadd.f32 %v612, %v660
        %v662 = vpop.f32.mrf.mxu0
        %v663 = vadd.f32 %v614, %v662
        %664 = vmatmul.bf16.gmra.mxu0 %v391
        %v665 = vpop.f32.mrf.mxu0
        %v666 = vadd.f32 %v617, %v665
        %v667 = vpop.f32.mrf.mxu0
        %v668 = vadd.f32 %v619, %v667
        %669 = vmatmul.bf16.gmra.mxu0 %v393
        %v670 = vpop.f32.mrf.mxu0
        %v671 = vadd.f32 %v622, %v670
        %v672 = vpop.f32.mrf.mxu0
        %v673 = vadd.f32 %v624, %v672
        %674 = vmatmul.bf16.gmra.mxu0 %v395
        %v675 = vpop.f32.mrf.mxu0
        %v676 = vadd.f32 %v627, %v675
        %v677 = vpop.f32.mrf.mxu0
        %v678 = vadd.f32 %v629, %v677
        %679 = vmatmul.bf16.gmra.mxu0 %v397
        %v680 = vpop.f32.mrf.mxu0
        %v681 = vadd.f32 %v632, %v680
        %v682 = vpop.f32.mrf.mxu0
        %v683 = vadd.f32 %v634, %v682
        %684 = vmatmul.bf16.gmra.mxu0 %v399
        %v685 = vpop.f32.mrf.mxu0
        %v686 = vadd.f32 %v637, %v685
        %v687 = vpop.f32.mrf.mxu0
        %v688 = vadd.f32 %v639, %v687
        %689 = vdwg.mxu0
        %690 = vmatpush.bf16.msra.mxu0 %v543
        %691 = vmatpush.bf16.msra.mxu0 %v541
        %692 = vmatpush.bf16.msra.mxu0 %v539
        %693 = vmatpush.bf16.msra.mxu0 %v537
        %694 = vmatpush.bf16.msra.mxu0 %v535
        %695 = vmatpush.bf16.msra.mxu0 %v533
        %696 = vmatpush.bf16.msra.mxu0 %v531
        %697 = vmatpush.bf16.msra.mxu0 %v529
        %698 = vmatmul.bf16.gmra.mxu0 %v384
        %v699 = vpop.f32.mrf.mxu0
        %v700 = vadd.f32 0.0, %v699
        %v701 = vpop.f32.mrf.mxu0
        %v702 = vadd.f32 0.0, %v701
        %703 = vmatmul.bf16.gmra.mxu0 %v386
        %v704 = vpop.f32.mrf.mxu0
        %v705 = vadd.f32 0.0, %v704
        %v706 = vpop.f32.mrf.mxu0
        %v707 = vadd.f32 0.0, %v706
        %708 = vmatmul.bf16.gmra.mxu0 %v388
        %v709 = vpop.f32.mrf.mxu0
        %v710 = vadd.f32 0.0, %v709
        %v711 = vpop.f32.mrf.mxu0
        %v712 = vadd.f32 0.0, %v711
        %713 = vmatmul.bf16.gmra.mxu0 %v390
        %v714 = vpop.f32.mrf.mxu0
        %v715 = vadd.f32 0.0, %v714
        %v716 = vpop.f32.mrf.mxu0
        %v717 = vadd.f32 0.0, %v716
        %718 = vmatmul.bf16.gmra.mxu0 %v392
        %v719 = vpop.f32.mrf.mxu0
        %v720 = vadd.f32 0.0, %v719
        %v721 = vpop.f32.mrf.mxu0
        %v722 = vadd.f32 0.0, %v721
        %723 = vmatmul.bf16.gmra.mxu0 %v394
        %v724 = vpop.f32.mrf.mxu0
        %v725 = vadd.f32 0.0, %v724
        %v726 = vpop.f32.mrf.mxu0
        %v727 = vadd.f32 0.0, %v726
        %728 = vmatmul.bf16.gmra.mxu0 %v396
        %v729 = vpop.f32.mrf.mxu0
        %v730 = vadd.f32 0.0, %v729
        %v731 = vpop.f32.mrf.mxu0
        %v732 = vadd.f32 0.0, %v731
        %733 = vmatmul.bf16.gmra.mxu0 %v398
        %v734 = vpop.f32.mrf.mxu0
        %v735 = vadd.f32 0.0, %v734
        %v736 = vpop.f32.mrf.mxu0
        %v737 = vadd.f32 0.0, %v736
        %738 = vdwg.mxu0
        %739 = vmatpush.bf16.msra.mxu0 %v559
        %740 = vmatpush.bf16.msra.mxu0 %v557
        %741 = vmatpush.bf16.msra.mxu0 %v555
        %742 = vmatpush.bf16.msra.mxu0 %v553
        %743 = vmatpush.bf16.msra.mxu0 %v551
        %744 = vmatpush.bf16.msra.mxu0 %v549
        %745 = vmatpush.bf16.msra.mxu0 %v547
        %746 = vmatpush.bf16.msra.mxu0 %v545
        %747 = vmatmul.bf16.gmra.mxu0 %v385
        %v748 = vpop.f32.mrf.mxu0
        %v749 = vadd.f32 %v700, %v748
        %v750 = vpop.f32.mrf.mxu0
        %v751 = vadd.f32 %v702, %v750
        %752 = vmatmul.bf16.gmra.mxu0 %v387
        %v753 = vpop.f32.mrf.mxu0
        %v754 = vadd.f32 %v705, %v753
        %v755 = vpop.f32.mrf.mxu0
        %v756 = vadd.f32 %v707, %v755
        %757 = vmatmul.bf16.gmra.mxu0 %v389
        %v758 = vpop.f32.mrf.mxu0
        %v759 = vadd.f32 %v710, %v758
        %v760 = vpop.f32.mrf.mxu0
        %v761 = vadd.f32 %v712, %v760
        %762 = vmatmul.bf16.gmra.mxu0 %v391
        %v763 = vpop.f32.mrf.mxu0
        %v764 = vadd.f32 %v715, %v763
        %v765 = vpop.f32.mrf.mxu0
        %v766 = vadd.f32 %v717, %v765
        %767 = vmatmul.bf16.gmra.mxu0 %v393
        %v768 = vpop.f32.mrf.mxu0
        %v769 = vadd.f32 %v720, %v768
        %v770 = vpop.f32.mrf.mxu0
        %v771 = vadd.f32 %v722, %v770
        %772 = vmatmul.bf16.gmra.mxu0 %v395
        %v773 = vpop.f32.mrf.mxu0
        %v774 = vadd.f32 %v725, %v773
        %v775 = vpop.f32.mrf.mxu0
        %v776 = vadd.f32 %v727, %v775
        %777 = vmatmul.bf16.gmra.mxu0 %v397
        %v778 = vpop.f32.mrf.mxu0
        %v779 = vadd.f32 %v730, %v778
        %v780 = vpop.f32.mrf.mxu0
        %v781 = vadd.f32 %v732, %v780
        %782 = vmatmul.bf16.gmra.mxu0 %v399
        %v783 = vpop.f32.mrf.mxu0
        %v784 = vadd.f32 %v735, %v783
        %v785 = vpop.f32.mrf.mxu0
        %v786 = vadd.f32 %v737, %v785
        %787 = vdwg.mxu0
        %v788 = vmul.f32 %v651, %v651
        %v789 = vmul.f32 %v653, %v653
        %v790 = vmul.f32 %v656, %v656
        %v791 = vmul.f32 %v658, %v658
        %v792 = vmul.f32 %v661, %v661
        %v793 = vmul.f32 %v663, %v663
        %v794 = vmul.f32 %v666, %v666
        %v795 = vmul.f32 %v668, %v668
        %v796 = vmul.f32 %v671, %v671
        %v797 = vmul.f32 %v673, %v673
        %v798 = vmul.f32 %v676, %v676
        %v799 = vmul.f32 %v678, %v678
        %v800 = vmul.f32 %v681, %v681
        %v801 = vmul.f32 %v683, %v683
        %v802 = vmul.f32 %v686, %v686
        %v803 = vmul.f32 %v688, %v688
        %v804 = vmul.f32 %v749, %v749
        %v805 = vmul.f32 %v751, %v751
        %v806 = vmul.f32 %v754, %v754
        %v807 = vmul.f32 %v756, %v756
        %v808 = vmul.f32 %v759, %v759
        %v809 = vmul.f32 %v761, %v761
        %v810 = vmul.f32 %v764, %v764
        %v811 = vmul.f32 %v766, %v766
        %v812 = vmul.f32 %v769, %v769
        %v813 = vmul.f32 %v771, %v771
        %v814 = vmul.f32 %v774, %v774
        %v815 = vmul.f32 %v776, %v776
        %v816 = vmul.f32 %v779, %v779
        %v817 = vmul.f32 %v781, %v781
        %v818 = vmul.f32 %v784, %v784
        %v819 = vmul.f32 %v786, %v786
        %v820 = vadd.f32 %v788, %v804
        %v821 = vadd.f32 %v789, %v805
        %v822 = vadd.f32 %v790, %v806
        %v823 = vadd.f32 %v791, %v807
        %v824 = vadd.f32 %v792, %v808
        %v825 = vadd.f32 %v793, %v809
        %v826 = vadd.f32 %v794, %v810
        %v827 = vadd.f32 %v795, %v811
        %v828 = vadd.f32 %v796, %v812
        %v829 = vadd.f32 %v797, %v813
        %v830 = vadd.f32 %v798, %v814
        %v831 = vadd.f32 %v799, %v815
        %v832 = vadd.f32 %v800, %v816
        %v833 = vadd.f32 %v801, %v817
        %v834 = vadd.f32 %v802, %v818
        %v835 = vadd.f32 %v803, %v819
        %v836 = vrsqrt.pop %v820
        %v837 = vmul.f32 %v836, %v820
        %v838 = vmul.f32 %v837, %v836
        %v839 = vmul.f32 0.5, %v838
        %v840 = vsub.f32 1.5, %v839
        %v841 = vmul.f32 %v836, %v840
        %v842 = vmul.f32 %v820, %v841
        %vm843 = vcmp.eq.f32.partialorder %v820, inf
        %v844 = vsel %vm843, %v820, %v842
        %vm845 = vcmp.eq.f32.partialorder %v820, 0.0
        %v846 = vand.u32 %v820, 2147483648
        %v847 = vsel %vm845, %v846, %v844
        %v848 = vrsqrt.pop %v821
        %v849 = vmul.f32 %v848, %v821
        %v850 = vmul.f32 %v849, %v848
        %v851 = vmul.f32 0.5, %v850
        %v852 = vsub.f32 1.5, %v851
        %v853 = vmul.f32 %v848, %v852
        %v854 = vmul.f32 %v821, %v853
        %vm855 = vcmp.eq.f32.partialorder %v821, inf
        %v856 = vsel %vm855, %v821, %v854
        %vm857 = vcmp.eq.f32.partialorder %v821, 0.0
        %v858 = vand.u32 %v821, 2147483648
        %v859 = vsel %vm857, %v858, %v856
        %v860 = vrsqrt.pop %v822
        %v861 = vmul.f32 %v860, %v822
        %v862 = vmul.f32 %v861, %v860
        %v863 = vmul.f32 0.5, %v862
        %v864 = vsub.f32 1.5, %v863
        %v865 = vmul.f32 %v860, %v864
        %v866 = vmul.f32 %v822, %v865
        %vm867 = vcmp.eq.f32.partialorder %v822, inf
        %v868 = vsel %vm867, %v822, %v866
        %vm869 = vcmp.eq.f32.partialorder %v822, 0.0
        %v870 = vand.u32 %v822, 2147483648
        %v871 = vsel %vm869, %v870, %v868
        %v872 = vrsqrt.pop %v823
        %v873 = vmul.f32 %v872, %v823
        %v874 = vmul.f32 %v873, %v872
        %v875 = vmul.f32 0.5, %v874
        %v876 = vsub.f32 1.5, %v875
        %v877 = vmul.f32 %v872, %v876
        %v878 = vmul.f32 %v823, %v877
        %vm879 = vcmp.eq.f32.partialorder %v823, inf
        %v880 = vsel %vm879, %v823, %v878
        %vm881 = vcmp.eq.f32.partialorder %v823, 0.0
        %v882 = vand.u32 %v823, 2147483648
        %v883 = vsel %vm881, %v882, %v880
        %v884 = vrsqrt.pop %v824
        %v885 = vmul.f32 %v884, %v824
        %v886 = vmul.f32 %v885, %v884
        %v887 = vmul.f32 0.5, %v886
        %v888 = vsub.f32 1.5, %v887
        %v889 = vmul.f32 %v884, %v888
        %v890 = vmul.f32 %v824, %v889
        %vm891 = vcmp.eq.f32.partialorder %v824, inf
        %v892 = vsel %vm891, %v824, %v890
        %vm893 = vcmp.eq.f32.partialorder %v824, 0.0
        %v894 = vand.u32 %v824, 2147483648
        %v895 = vsel %vm893, %v894, %v892
        %v896 = vrsqrt.pop %v825
        %v897 = vmul.f32 %v896, %v825
        %v898 = vmul.f32 %v897, %v896
        %v899 = vmul.f32 0.5, %v898
        %v900 = vsub.f32 1.5, %v899
        %v901 = vmul.f32 %v896, %v900
        %v902 = vmul.f32 %v825, %v901
        %vm903 = vcmp.eq.f32.partialorder %v825, inf
        %v904 = vsel %vm903, %v825, %v902
        %vm905 = vcmp.eq.f32.partialorder %v825, 0.0
        %v906 = vand.u32 %v825, 2147483648
        %v907 = vsel %vm905, %v906, %v904
        %v908 = vrsqrt.pop %v826
        %v909 = vmul.f32 %v908, %v826
        %v910 = vmul.f32 %v909, %v908
        %v911 = vmul.f32 0.5, %v910
        %v912 = vsub.f32 1.5, %v911
        %v913 = vmul.f32 %v908, %v912
        %v914 = vmul.f32 %v826, %v913
        %vm915 = vcmp.eq.f32.partialorder %v826, inf
        %v916 = vsel %vm915, %v826, %v914
        %vm917 = vcmp.eq.f32.partialorder %v826, 0.0
        %v918 = vand.u32 %v826, 2147483648
        %v919 = vsel %vm917, %v918, %v916
        %v920 = vrsqrt.pop %v827
        %v921 = vmul.f32 %v920, %v827
        %v922 = vmul.f32 %v921, %v920
        %v923 = vmul.f32 0.5, %v922
        %v924 = vsub.f32 1.5, %v923
        %v925 = vmul.f32 %v920, %v924
        %v926 = vmul.f32 %v827, %v925
        %vm927 = vcmp.eq.f32.partialorder %v827, inf
        %v928 = vsel %vm927, %v827, %v926
        %vm929 = vcmp.eq.f32.partialorder %v827, 0.0
        %v930 = vand.u32 %v827, 2147483648
        %v931 = vsel %vm929, %v930, %v928
        %v932 = vrsqrt.pop %v828
        %v933 = vmul.f32 %v932, %v828
        %v934 = vmul.f32 %v933, %v932
        %v935 = vmul.f32 0.5, %v934
        %v936 = vsub.f32 1.5, %v935
        %v937 = vmul.f32 %v932, %v936
        %v938 = vmul.f32 %v828, %v937
        %vm939 = vcmp.eq.f32.partialorder %v828, inf
        %v940 = vsel %vm939, %v828, %v938
        %vm941 = vcmp.eq.f32.partialorder %v828, 0.0
        %v942 = vand.u32 %v828, 2147483648
        %v943 = vsel %vm941, %v942, %v940
        %v944 = vrsqrt.pop %v829
        %v945 = vmul.f32 %v944, %v829
        %v946 = vmul.f32 %v945, %v944
        %v947 = vmul.f32 0.5, %v946
        %v948 = vsub.f32 1.5, %v947
        %v949 = vmul.f32 %v944, %v948
        %v950 = vmul.f32 %v829, %v949
        %vm951 = vcmp.eq.f32.partialorder %v829, inf
        %v952 = vsel %vm951, %v829, %v950
        %vm953 = vcmp.eq.f32.partialorder %v829, 0.0
        %v954 = vand.u32 %v829, 2147483648
        %v955 = vsel %vm953, %v954, %v952
        %v956 = vrsqrt.pop %v830
        %v957 = vmul.f32 %v956, %v830
        %v958 = vmul.f32 %v957, %v956
        %v959 = vmul.f32 0.5, %v958
        %v960 = vsub.f32 1.5, %v959
        %v961 = vmul.f32 %v956, %v960
        %v962 = vmul.f32 %v830, %v961
        %vm963 = vcmp.eq.f32.partialorder %v830, inf
        %v964 = vsel %vm963, %v830, %v962
        %vm965 = vcmp.eq.f32.partialorder %v830, 0.0
        %v966 = vand.u32 %v830, 2147483648
        %v967 = vsel %vm965, %v966, %v964
        %v968 = vrsqrt.pop %v831
        %v969 = vmul.f32 %v968, %v831
        %v970 = vmul.f32 %v969, %v968
        %v971 = vmul.f32 0.5, %v970
        %v972 = vsub.f32 1.5, %v971
        %v973 = vmul.f32 %v968, %v972
        %v974 = vmul.f32 %v831, %v973
        %vm975 = vcmp.eq.f32.partialorder %v831, inf
        %v976 = vsel %vm975, %v831, %v974
        %vm977 = vcmp.eq.f32.partialorder %v831, 0.0
        %v978 = vand.u32 %v831, 2147483648
        %v979 = vsel %vm977, %v978, %v976
        %v980 = vrsqrt.pop %v832
        %v981 = vmul.f32 %v980, %v832
        %v982 = vmul.f32 %v981, %v980
        %v983 = vmul.f32 0.5, %v982
        %v984 = vsub.f32 1.5, %v983
        %v985 = vmul.f32 %v980, %v984
        %v986 = vmul.f32 %v832, %v985
        %vm987 = vcmp.eq.f32.partialorder %v832, inf
        %v988 = vsel %vm987, %v832, %v986
        %vm989 = vcmp.eq.f32.partialorder %v832, 0.0
        %v990 = vand.u32 %v832, 2147483648
        %v991 = vsel %vm989, %v990, %v988
        %v992 = vrsqrt.pop %v833
        %v993 = vmul.f32 %v992, %v833
        %v994 = vmul.f32 %v993, %v992
        %v995 = vmul.f32 0.5, %v994
        %v996 = vsub.f32 1.5, %v995
        %v997 = vmul.f32 %v992, %v996
        %v998 = vmul.f32 %v833, %v997
        %vm999 = vcmp.eq.f32.partialorder %v833, inf
        %v1000 = vsel %vm999, %v833, %v998
        %vm1001 = vcmp.eq.f32.partialorder %v833, 0.0
        %v1002 = vand.u32 %v833, 2147483648
        %v1003 = vsel %vm1001, %v1002, %v1000
        %v1004 = vrsqrt.pop %v834
        %v1005 = vmul.f32 %v1004, %v834
        %v1006 = vmul.f32 %v1005, %v1004
        %v1007 = vmul.f32 0.5, %v1006
        %v1008 = vsub.f32 1.5, %v1007
        %v1009 = vmul.f32 %v1004, %v1008
        %v1010 = vmul.f32 %v834, %v1009
        %vm1011 = vcmp.eq.f32.partialorder %v834, inf
        %v1012 = vsel %vm1011, %v834, %v1010
        %vm1013 = vcmp.eq.f32.partialorder %v834, 0.0
        %v1014 = vand.u32 %v834, 2147483648
        %v1015 = vsel %vm1013, %v1014, %v1012
        %v1016 = vrsqrt.pop %v835
        %v1017 = vmul.f32 %v1016, %v835
        %v1018 = vmul.f32 %v1017, %v1016
        %v1019 = vmul.f32 0.5, %v1018
        %v1020 = vsub.f32 1.5, %v1019
        %v1021 = vmul.f32 %v1016, %v1020
        %v1022 = vmul.f32 %v835, %v1021
        %vm1023 = vcmp.eq.f32.partialorder %v835, inf
        %v1024 = vsel %vm1023, %v835, %v1022
        %vm1025 = vcmp.eq.f32.partialorder %v835, 0.0
        %v1026 = vand.u32 %v835, 2147483648
        %v1027 = vsel %vm1025, %v1026, %v1024
        %1028 = vxpose.xlu0.b32.start [1/16] %v847, 128
        %1029 = vxpose.xlu0.b32.cont [2/16] %v859, 128
        %1030 = vxpose.xlu0.b32.cont [3/16] %v871, 128
        %1031 = vxpose.xlu0.b32.cont [4/16] %v883, 128
        %1032 = vxpose.xlu0.b32.cont [5/16] %v895, 128
        %1033 = vxpose.xlu0.b32.cont [6/16] %v907, 128
        %1034 = vxpose.xlu0.b32.cont [7/16] %v919, 128
        %1035 = vxpose.xlu0.b32.cont [8/16] %v931, 128
        %1036 = vxpose.xlu0.b32.cont [9/16] %v943, 128
        %1037 = vxpose.xlu0.b32.cont [10/16] %v955, 128
        %1038 = vxpose.xlu0.b32.cont [11/16] %v967, 128
        %1039 = vxpose.xlu0.b32.cont [12/16] %v979, 128
        %1040 = vxpose.xlu0.b32.cont [13/16] %v991, 128
        %1041 = vxpose.xlu0.b32.cont [14/16] %v1003, 128
        %1042 = vxpose.xlu0.b32.cont [15/16] %v1015, 128
        %1043 = vxpose.xlu0.b32.end [16/16] %v1027, 128
        %v1044 = vpop.trf.xlu0
        %v1045 = vpop.trf.xlu0
        %v1046 = vpop.trf.xlu0
        %v1047 = vpop.trf.xlu0
        %v1048 = vpop.trf.xlu0
        %v1049 = vpop.trf.xlu0
        %v1050 = vpop.trf.xlu0
        %v1051 = vpop.trf.xlu0
        %v1052 = vpop.trf.xlu0
        %v1053 = vpop.trf.xlu0
        %v1054 = vpop.trf.xlu0
        %v1055 = vpop.trf.xlu0
        %v1056 = vpop.trf.xlu0
        %v1057 = vpop.trf.xlu0
        %v1058 = vpop.trf.xlu0
        %v1059 = vpop.trf.xlu0
        %1060 = vst [vmem:[%s299] sm:$0xff] %v1044
        %1061 = vst [vmem:[%s299 + $0x8] sm:$0xff] %v1045
        %1062 = vst [vmem:[%s299 + $0x10] sm:$0xff] %v1046
        %1063 = vst [vmem:[%s299 + $0x18] sm:$0xff] %v1047
        %1064 = vst [vmem:[%s299 + $0x20] sm:$0xff] %v1048
        %1065 = vst [vmem:[%s299 + $0x28] sm:$0xff] %v1049
        %1066 = vst [vmem:[%s299 + $0x30] sm:$0xff] %v1050
        %1067 = vst [vmem:[%s299 + $0x38] sm:$0xff] %v1051
        %1068 = vst [vmem:[%s299 + $0x40] sm:$0xff] %v1052
        %1069 = vst [vmem:[%s299 + $0x48] sm:$0xff] %v1053
        %1070 = vst [vmem:[%s299 + $0x50] sm:$0xff] %v1054
        %1071 = vst [vmem:[%s299 + $0x58] sm:$0xf] %v1055
        %p1072 = scmp.lt.s32.totalorder %s24, 1
        %s1073 = scalar_select %p1072, %s24, 1
        %p1074 = scmp.lt.s32.totalorder %s25, 0
        %s1075 = scalar_select %p1074, %s25, 0
        %s1076 = smul.addr %s1073, 12
        %s1077 = sadd.s32 %s1075, %s1076
        %s1078 = smul.addr %s1077, 8
        %s1079 = scalar_lea.vmem %s3, %s1078
        // Predicated region
        $region45: #{tpu_custom_call.1} parent=31 // pred_check
          %p1080 = pneg %p137
        $region46: #{tpu_custom_call.1} parent=31 // pred_check_branch
          %1082 = sbr.rel (%p1080) target = $region48
        $region47: #{tpu_custom_call.1} parent=31 // pred_region
          _
        $region48: #{tpu_custom_call.1} parent=31 // pred_fallthru
          _
      $region32: #{tpu_custom_call.1} parent=5 // pred_fallthru
        _
      %p1083 = scmp.le.s32.totalorder 2, %s15
      // Predicated region
      $region49: #{tpu_custom_call.1} parent=5 // pred_check
        %p1084 = pneg %p1083
      $region50: #{tpu_custom_call.1} parent=5 // pred_check_branch
        %1086 = sbr.rel (%p1084) target = $region52
      $region51: #{tpu_custom_call.1} parent=5 // pred_region
        %s1087 = ssub.s32 %s15, 2
        // Predicated region
        $region53: #{tpu_custom_call.1} parent=51 // pred_check
          %p1088 = pneg %p143
        $region54: #{tpu_custom_call.1} parent=51 // pred_check_branch
          %1090 = sbr.rel (%p1088) target = $region56
        $region55: #{tpu_custom_call.1} parent=51 // pred_region
          %p1091 = scmp.lt.s32.totalorder %s26, 1
          %s1092 = scalar_select %p1091, %s26, 1
          %p1093 = scmp.lt.s32.totalorder %s27, 0
          %s1094 = scalar_select %p1093, %s27, 0
          %s1095 = smul.addr %s1092, 12
          %s1096 = sadd.s32 %s1094, %s1095
          %s1097 = smul.addr %s1096, 8
          %s1098 = scalar_lea.vmem %s3, %s1097
        $region56: #{tpu_custom_call.1} parent=51 // pred_fallthru
          _
      $region52: #{tpu_custom_call.1} parent=5 // pred_fallthru
        _
    $region6: #{tpu_custom_call.1} parent=1 // loop_footer
      %s19 = sadd.s32 1, %s15
    $region7: #{tpu_custom_call.1} parent=1 // loop_footer_branch
      %14 = sbr.rel target = $region3
    $region8: #{tpu_custom_call.1} parent=1 // loop_exit
      _
    %1099 = vsyncpa [#allocation3], 1
    %s1100 = scalar_lea.sflag [#allocation3], 1
    %1101 = vsyncpa %s1100, 1
    %1102 = vsyncpa [#allocation5], 1
    %s1103 = scalar_lea.sflag [#allocation5], 1
    %1104 = vsyncpa %s1103, 1

</llo_original>
